<compile_context>
chip_gen: v7x
topology: tpu7x:2x2x1
jax: 0.10.0
libtpu: 0.0.40
codegen_flags: <defaults>
</compile_context>

<pallas_src>
import jax
import jax.numpy as jnp
from jax.experimental import pallas as pl
from jax.experimental.pallas import tpu as pltpu


def _round_up(n, m):
    return ((n + m - 1) // m) * m


def _tpu_info():
    try:
        return pltpu.get_tpu_info()
    except Exception:
        return None


def _vmem_capacity_bytes():
    info = _tpu_info()
    if info is not None:
        v = getattr(info, "vmem_capacity_bytes", None)
        if v:
            try:
                return int(v)
            except (TypeError, ValueError):
                pass
    return 64 << 20  # conservative default (v7x per-TC VMEM) if the query fails


def _num_tensorcores():
    info = _tpu_info()
    if info is None:
        return 1
    for name in ("num_cores", "core_count", "num_tensorcores", "tensorcores_per_chip"):
        v = getattr(info, name, None)
        if v:
            try:
                return max(1, int(v))
            except (TypeError, ValueError):
                pass
    return 1


def _pad2(a, rows, cols, dtype):
    """Cast + zero-pad a 2-D parameter to (rows, cols); skip pad when aligned."""
    a = a.astype(dtype)
    if a.shape == (rows, cols):
        return a
    return jnp.pad(a, ((0, rows - a.shape[0]), (0, cols - a.shape[1])))


def _pad_row(a, cols, dtype):
    a = a.astype(dtype)
    if a.shape[0] != cols:
        a = jnp.pad(a, (0, cols - a.shape[0]))
    return a.reshape(1, cols)


# ----------------------------------------------------------------------------- kernels

def _mlp_resident_kernel(x_ref, w1_ref, b1_ref, w2_ref, b2_ref, o_ref):
    """One batch block, weights fully VMEM-resident:
       out = relu(x @ W1 + b1) @ W2 + b2  (bf16 MXU inputs, f32 accumulation)."""
    x = x_ref[...].astype(jnp.bfloat16)                 # in-kernel cast (saves an HBM pass)
    h = jnp.dot(x, w1_ref[...], preferred_element_type=jnp.float32)
    h = jnp.maximum(h + b1_ref[...], 0.0)               # f32 bias + ReLU
    h = h.astype(jnp.bfloat16)                          # intentional: 2nd matmul at bf16 rate
    y = jnp.dot(h, w2_ref[...], preferred_element_type=jnp.float32)
    o_ref[...] = (y + b2_ref[...]).astype(o_ref.dtype)


def _mlp_hidden_tiled_kernel(x_ref, w1_ref, b1_ref, w2_ref, b2_ref, o_ref, acc_ref):
    """Same MLP with the hidden dim tiled over grid axis 1 (reduction axis):
       acc += relu(x @ W1[:, k] + b1[k]) @ W2[k, :];   out = acc + b2 at last k."""
    k = pl.program_id(1)

    @pl.when(k == 0)
    def _():
        acc_ref[...] = jnp.zeros_like(acc_ref)

    x = x_ref[...].astype(jnp.bfloat16)
    h = jnp.dot(x, w1_ref[...], preferred_element_type=jnp.float32)
    h = jnp.maximum(h + b1_ref[...], 0.0).astype(jnp.bfloat16)
    acc_ref[...] += jnp.dot(h, w2_ref[...], preferred_element_type=jnp.float32)

    @pl.when(k == pl.num_programs(1) - 1)
    def _():
        o_ref[...] = (acc_ref[...] + b2_ref[...]).astype(o_ref.dtype)


# ----------------------------------------------------------------------------- wrapper

def weight_parallelized_forward(x, w1, b1, w2, b2, *, chunks_amount=2,
                                block_m=512, block_h=512,
                                out_dtype=jnp.float32,
                                force_hidden_tiling=False,
                                single_buffer_weights=True):
    """Pallas equivalent of Weight_Parallelized_Model.forward for one pipeline stage.

    `chunks_amount` is accepted for API parity with the PyTorch module; its chunk
    loop is pipeline-communication plumbing and a numerical no-op
    (concat(layer(chunk)) == layer(x)), so the batch is tiled into hardware-friendly
    blocks instead.
    """
    del chunks_amount  # forward semantics are independent of the chunking
    B, d_in = x.shape
    d_hid = w1.shape[1]
    d_out = w2.shape[1]

    f32, bf16 = jnp.float32, jnp.bfloat16
    x_bytes = jnp.dtype(x.dtype).itemsize
    out_bytes = jnp.dtype(out_dtype).itemsize

    # Lane-dense feature dims (multiples of 128).
    din_p = _round_up(d_in, 128)
    dh_p = _round_up(d_hid, 128)
    do_p = _round_up(d_out, 128)

    # MXU-friendly batch tile: 128-row multiples; 16-row (bf16 sublane pack) only
    # for genuinely tiny batches.
    m_align = 16 if B <= 64 else 128
    bm = _round_up(min(block_m, _round_up(B, m_align)), m_align)

    # Chips with >= 2 TensorCores (v7x): keep >= 2 batch blocks when the batch is
    # big enough, so the "parallel" axis can be sharded across cores.
    if _num_tensorcores() >= 2 and _round_up(B, bm) == bm and bm >= 2 * m_align and B > m_align:
        bm = _round_up((B + 1) // 2, m_align)

    b_p = _round_up(B, bm)
    n_blocks = b_p // bm

    # VMEM budget: physical per-core capacity minus headroom for compiler scratch.
    vmem_budget = max(_vmem_capacity_bytes() - (8 << 20), 16 << 20)

    def _resident_est(bm_):
        return (2 * bm_ * din_p * x_bytes                   # x blocks (double-buffered)
                + 2 * bm_ * do_p * out_bytes                # out blocks
                + 2 * (din_p * dh_p + dh_p * do_p) * 2      # weights (2 bufs for safety)
                + 2 * (dh_p + do_p) * 4                     # biases
                + bm_ * din_p * 2                           # in-kernel bf16 copy of x
                + bm_ * dh_p * 4 + bm_ * do_p * 4)          # live f32 activations

    use_hidden_tiling = force_hidden_tiling or _resident_est(bm) > int(0.8 * vmem_budget)

    # Zero-padding is numerically exact: padded input features hit zero weight rows,
    # padded hidden columns get zero bias (relu(0)=0) and zero W2 rows, and padded
    # output columns / batch rows are sliced off at the end.
    if not use_hidden_tiling:
        x_p = x if (b_p == B and din_p == d_in) else \
            jnp.pad(x, ((0, b_p - B), (0, din_p - d_in)))
        w1_p = _pad2(w1, din_p, dh_p, bf16)
        w2_p = _pad2(w2, dh_p, do_p, bf16)
        b1_p = _pad_row(b1, dh_p, f32)
        b2_p = _pad_row(b2, do_p, f32)

        def _resident_spec(shape):
            # Constant index_map -> one VMEM buffer is enough (no double-buffering).
            if single_buffer_weights:
                try:
                    return pl.BlockSpec(shape, lambda i: (0, 0),
                                        pipeline_mode=pl.Buffered(1))
                except (AttributeError, TypeError):
                    pass  # older Pallas without pipeline_mode support
            return pl.BlockSpec(shape, lambda i: (0, 0))

        grid_spec = pltpu.PrefetchScalarGridSpec(
            num_scalar_prefetch=0,
            grid=(n_blocks,),
            in_specs=[
                pl.BlockSpec((bm, din_p), lambda i: (i, 0)),   # per-block input
                _resident_spec((din_p, dh_p)),                 # W1 (resident)
                _resident_spec((1, dh_p)),                     # b1
                _resident_spec((dh_p, do_p)),                  # W2 (resident)
                _resident_spec((1, do_p)),                     # b2
            ],
            out_specs=pl.BlockSpec((bm, do_p), lambda i: (i, 0)),
        )
        kernel = _mlp_resident_kernel
        semantics = ("parallel",)
        vmem_est = _resident_est(bm)
        flop_k = din_p * dh_p + dh_p * do_p
    else:
        bh = _round_up(min(block_h, dh_p), 128)

        def _tiled_est(bm_, bh_):
            return (2 * bm_ * din_p * x_bytes
                    + 2 * bm_ * do_p * out_bytes
                    + 2 * (din_p * bh_ + bh_ * do_p) * 2     # weight tiles (double-buffered)
                    + 2 * (bh_ + do_p) * 4
                    + bm_ * din_p * 2
                    + bm_ * bh_ * 4                           # h tile
                    + bm_ * do_p * 4)                         # accumulator scratch

        # Shrink the hidden tile, then the batch tile, until we fit the budget.
        while bh > 128 and _tiled_est(bm, bh) > int(0.8 * vmem_budget):
            bh = _round_up(bh // 2, 128)
        while bm > m_align and _tiled_est(bm, bh) > int(0.8 * vmem_budget):
            bm = _round_up(bm // 2, m_align)
        b_p = _round_up(B, bm)
        n_blocks = b_p // bm

        dh_t = _round_up(d_hid, bh)
        n_k = dh_t // bh

        x_p = x if (b_p == B and din_p == d_in) else \
            jnp.pad(x, ((0, b_p - B), (0, din_p - d_in)))
        w1_p = _pad2(w1, din_p, dh_t, bf16)
        w2_p = _pad2(w2, dh_t, do_p, bf16)
        b1_p = _pad_row(b1, dh_t, f32)
        b2_p = _pad_row(b2, do_p, f32)

        grid_spec = pltpu.PrefetchScalarGridSpec(
            num_scalar_prefetch=0,
            grid=(n_blocks, n_k),
            in_specs=[
                pl.BlockSpec((bm, din_p), lambda i, k: (i, 0)),  # x block (constant over k)
                pl.BlockSpec((din_p, bh), lambda i, k: (0, k)),  # W1 column tile
                pl.BlockSpec((1, bh),     lambda i, k: (0, k)),  # b1 tile
                pl.BlockSpec((bh, do_p),  lambda i, k: (k, 0)),  # W2 row tile
                pl.BlockSpec((1, do_p),   lambda i, k: (0, 0)),  # b2
            ],
            out_specs=pl.BlockSpec((bm, do_p), lambda i, k: (i, 0)),
            scratch_shapes=[pltpu.VMEM((bm, do_p), jnp.float32)],
        )
        kernel = _mlp_hidden_tiled_kernel
        semantics = ("parallel", "arbitrary")
        vmem_est = _tiled_est(bm, bh)
        flop_k = din_p * dh_t + dh_t * do_p

    vmem_limit = min(int(vmem_est * 1.5) + (4 << 20), vmem_budget)

    cost = pl.CostEstimate(
        flops=2 * b_p * flop_k,
        transcendentals=0,
        bytes_accessed=(x_p.size * x_bytes + (w1_p.size + w2_p.size) * 2
                        + b1_p.size * 4 + b2_p.size * 4 + b_p * do_p * out_bytes),
    )

    out_p = pl.pallas_call(
        kernel,
        out_shape=jax.ShapeDtypeStruct((b_p, do_p), out_dtype),
        grid_spec=grid_spec,
        compiler_params=pltpu.CompilerParams(
            dimension_semantics=semantics,   # batch blocks independent; d_hid axis is a reduction
            vmem_limit_bytes=vmem_limit,
        ),
        cost_estimate=cost,
    )(x_p, w1_p, b1_p, w2_p, b2_p)

    return out_p[:B, :d_out]


# ----------------------------------------------------------------------------- references

def _reference_forward_f32(x, w1, b1, w2, b2, chunks_amount=2):
    # Plain-JAX mirror of the PyTorch forward: chunk -> f32 layer -> concat.
    outs = []
    for c in jnp.split(x, chunks_amount, axis=0):
        h = jnp.maximum(c @ w1 + b1, 0.0)
        outs.append(h @ w2 + b2)
    return jnp.concatenate(outs, axis=0)


def _reference_forward_bf16(x, w1, b1, w2, b2):
    # Same bf16-in / f32-accumulate recipe as the kernel (tight check).
    bf16, f32 = jnp.bfloat16, jnp.float32
    h = jnp.dot(x.astype(bf16), w1.astype(bf16), preferred_element_type=f32) + b1
    h = jnp.maximum(h, 0.0).astype(bf16)
    return jnp.dot(h, w2.astype(bf16), preferred_element_type=f32) + b2


if __name__ == "__main__":
    # --- Test 1: canonical small stage (Sequential(Linear, ReLU, Linear)),
    # resident-weight path ------------------------------------------------------
    B, d_in, d_hid, d_out = 16, 32, 64, 48
    chunks_amount = 2

    key = jax.random.PRNGKey(0)
    kx, kw1, kb1, kw2, kb2 = jax.random.split(key, 5)

    x = jax.random.normal(kx, (B, d_in), dtype=jnp.float32)
    # Deterministic synthetic parameters, roughly matching nn.Linear init scale.
    w1 = jax.random.uniform(kw1, (d_in, d_hid), jnp.float32, -1.0, 1.0) / jnp.sqrt(d_in)
    b1 = jax.random.uniform(kb1, (d_hid,), jnp.float32, -1.0, 1.0) / jnp.sqrt(d_in)
    w2 = jax.random.uniform(kw2, (d_hid, d_out), jnp.float32, -1.0, 1.0) / jnp.sqrt(d_hid)
    b2 = jax.random.uniform(kb2, (d_out,), jnp.float32, -1.0, 1.0) / jnp.sqrt(d_hid)

    try:
        out = weight_parallelized_forward(x, w1, b1, w2, b2, chunks_amount=chunks_amount)
    except Exception:
        # Fallback for Pallas builds that reject Buffered(1) at lowering time; the
        # VMEM budget already assumes double-buffered weights, so this cannot OOM.
        out = weight_parallelized_forward(x, w1, b1, w2, b2, chunks_amount=chunks_amount,
                                          single_buffer_weights=False)
    out = jax.block_until_ready(out)
    assert out.shape == (B, d_out)
    assert jnp.allclose(out, _reference_forward_bf16(x, w1, b1, w2, b2),
                        atol=2e-4, rtol=2e-4), "kernel mismatch (resident path)"
    assert jnp.allclose(out, _reference_forward_f32(x, w1, b1, w2, b2, chunks_amount),
                        atol=5e-2, rtol=5e-2), "semantic mismatch (resident path)"

    # --- Test 2: exercise the hidden-dim-tiled (v7x-friendly) accumulator path --
    B2, d_in2, d_hid2, d_out2 = 48, 64, 256, 128
    k2 = jax.random.split(jax.random.PRNGKey(1), 5)
    x2 = jax.random.normal(k2[0], (B2, d_in2), dtype=jnp.float32)
    w1b = jax.random.uniform(k2[1], (d_in2, d_hid2), jnp.float32, -1.0, 1.0) / jnp.sqrt(d_in2)
    b1b = jax.random.uniform(k2[2], (d_hid2,), jnp.float32, -1.0, 1.0) / jnp.sqrt(d_in2)
    w2b = jax.random.uniform(k2[3], (d_hid2, d_out2), jnp.float32, -1.0, 1.0) / jnp.sqrt(d_hid2)
    b2b = jax.random.uniform(k2[4], (d_out2,), jnp.float32, -1.0, 1.0) / jnp.sqrt(d_hid2)

    out2 = weight_parallelized_forward(x2, w1b, b1b, w2b, b2b,
                                       force_hidden_tiling=True, block_h=128)
    out2 = jax.block_until_ready(out2)
    assert out2.shape == (B2, d_out2)
    assert jnp.allclose(out2, _reference_forward_bf16(x2, w1b, b1b, w2b, b2b),
                        atol=1e-3, rtol=1e-3), "kernel mismatch (hidden-tiled path)"
    assert jnp.allclose(out2, _reference_forward_f32(x2, w1b, b1b, w2b, b2b, 2),
                        atol=5e-2, rtol=5e-2), "semantic mismatch (hidden-tiled path)"

    # TODO(synk): backward() relies on autograd.grad + dist send/recv of grads across
    # pipeline ranks; no single-kernel Pallas equivalent, so only forward is implemented.
    print("KERNEL_OK")
</pallas_src>

<mosaic_0001>
module attributes {stable_mosaic.version = 11 : i64} {
  func.func @_mlp_resident_kernel(%arg0: i32, %arg1: memref<16x128xf32, #tpu.memory_space<vmem>>, %arg2: memref<128x128xbf16, #tpu.memory_space<vmem>>, %arg3: memref<1x128xf32, #tpu.memory_space<vmem>>, %arg4: memref<128x128xbf16, #tpu.memory_space<vmem>>, %arg5: memref<1x128xf32, #tpu.memory_space<vmem>>, %arg6: memref<16x128xf32, #tpu.memory_space<vmem>>) attributes {dimension_semantics = [#tpu.dimension_semantics<parallel>], iteration_bounds = array<i64: 1>, scalar_prefetch = 0 : i64, scratch_operands = 0 : i64, tpu.core_type = #tpu.core_type<tc>, window_params = [{transform_indices = @transform_0, window_bounds = array<i64: 16, 128>}, {pipeline_mode = #tpu.pipeline_mode<synchronous>, transform_indices = @transform_1, window_bounds = array<i64: 128, 128>}, {pipeline_mode = #tpu.pipeline_mode<synchronous>, transform_indices = @transform_2, window_bounds = array<i64: 1, 128>}, {pipeline_mode = #tpu.pipeline_mode<synchronous>, transform_indices = @transform_3, window_bounds = array<i64: 128, 128>}, {pipeline_mode = #tpu.pipeline_mode<synchronous>, transform_indices = @transform_4, window_bounds = array<i64: 1, 128>}, {transform_indices = @transform_5, window_bounds = array<i64: 16, 128>}]} {
    %c0 = arith.constant 0 : index
    %c0_0 = arith.constant 0 : index
    %0 = vector.load %arg1[%c0, %c0_0] : memref<16x128xf32, #tpu.memory_space<vmem>>, vector<16x128xf32>
    %1 = arith.truncf %0 : vector<16x128xf32> to vector<16x128xbf16>
    %c0_1 = arith.constant 0 : index
    %c0_2 = arith.constant 0 : index
    %2 = vector.load %arg2[%c0_1, %c0_2] : memref<128x128xbf16, #tpu.memory_space<vmem>>, vector<128x128xbf16>
    %cst = arith.constant dense<0.000000e+00> : vector<16x128xf32>
    %3 = tpu.matmul %1, %2, %cst {dimension_numbers = #tpu.dot_dimension_numbers<[1], [0], [0], [1], [0, 0, 1, 1], [], []>} : vector<16x128xbf16>, vector<128x128xbf16>, vector<16x128xf32> -> vector<16x128xf32>
    %c0_3 = arith.constant 0 : index
    %c0_4 = arith.constant 0 : index
    %4 = vector.load %arg3[%c0_3, %c0_4] : memref<1x128xf32, #tpu.memory_space<vmem>>, vector<1x128xf32>
    %5 = vector.broadcast %4 : vector<1x128xf32> to vector<16x128xf32>
    %6 = arith.addf %3, %5 : vector<16x128xf32>
    %cst_5 = arith.constant 0.000000e+00 : f32
    %7 = vector.broadcast %cst_5 : f32 to vector<16x128xf32>
    %8 = arith.maximumf %6, %7 : vector<16x128xf32>
    %9 = arith.truncf %8 : vector<16x128xf32> to vector<16x128xbf16>
    %c0_6 = arith.constant 0 : index
    %c0_7 = arith.constant 0 : index
    %10 = vector.load %arg4[%c0_6, %c0_7] : memref<128x128xbf16, #tpu.memory_space<vmem>>, vector<128x128xbf16>
    %cst_8 = arith.constant dense<0.000000e+00> : vector<16x128xf32>
    %11 = tpu.matmul %9, %10, %cst_8 {dimension_numbers = #tpu.dot_dimension_numbers<[1], [0], [0], [1], [0, 0, 1, 1], [], []>} : vector<16x128xbf16>, vector<128x128xbf16>, vector<16x128xf32> -> vector<16x128xf32>
    %c0_9 = arith.constant 0 : index
    %c0_10 = arith.constant 0 : index
    %12 = vector.load %arg5[%c0_9, %c0_10] : memref<1x128xf32, #tpu.memory_space<vmem>>, vector<1x128xf32>
    %13 = vector.broadcast %12 : vector<1x128xf32> to vector<16x128xf32>
    %14 = arith.addf %11, %13 : vector<16x128xf32>
    %c0_11 = arith.constant 0 : index
    %c0_12 = arith.constant 0 : index
    %15 = vector.load %arg6[%c0_11, %c0_12] : memref<16x128xf32, #tpu.memory_space<vmem>>, vector<16x128xf32>
    tpu.vector_store %arg6[%c0_11, %c0_12], %14 {strides = array<i32>} : memref<16x128xf32, #tpu.memory_space<vmem>>, vector<16x128xf32>,
    return
  }
  func.func @transform_0(%arg0: i32) -> (i32, i32) {
    %c0_i32 = arith.constant 0 : i32
    %c0_i32_0 = arith.constant 0 : i32
    return %arg0, %c0_i32 : i32, i32
  }
  func.func @transform_1(%arg0: i32) -> (i32, i32) {
    %c0_i32 = arith.constant 0 : i32
    %c0_i32_0 = arith.constant 0 : i32
    %c0_i32_1 = arith.constant 0 : i32
    return %c0_i32, %c0_i32_0 : i32, i32
  }
  func.func @transform_2(%arg0: i32) -> (i32, i32) {
    %c0_i32 = arith.constant 0 : i32
    %c0_i32_0 = arith.constant 0 : i32
    %c0_i32_1 = arith.constant 0 : i32
    return %c0_i32, %c0_i32_0 : i32, i32
  }
  func.func @transform_3(%arg0: i32) -> (i32, i32) {
    %c0_i32 = arith.constant 0 : i32
    %c0_i32_0 = arith.constant 0 : i32
    %c0_i32_1 = arith.constant 0 : i32
    return %c0_i32, %c0_i32_0 : i32, i32
  }
  func.func @transform_4(%arg0: i32) -> (i32, i32) {
    %c0_i32 = arith.constant 0 : i32
    %c0_i32_0 = arith.constant 0 : i32
    %c0_i32_1 = arith.constant 0 : i32
    return %c0_i32, %c0_i32_0 : i32, i32
  }
  func.func @transform_5(%arg0: i32) -> (i32, i32) {
    %c0_i32 = arith.constant 0 : i32
    %c0_i32_0 = arith.constant 0 : i32
    return %arg0, %c0_i32 : i32, i32
  }
}

module attributes {stable_mosaic.version = 11 : i64} {
  func.func @_mlp_resident_kernel(%arg0: i32, %arg1: memref<16x128xf32, #tpu.memory_space<vmem>>, %arg2: memref<128x128xbf16, #tpu.memory_space<vmem>>, %arg3: memref<1x128xf32, #tpu.memory_space<vmem>>, %arg4: memref<128x128xbf16, #tpu.memory_space<vmem>>, %arg5: memref<1x128xf32, #tpu.memory_space<vmem>>, %arg6: memref<16x128xf32, #tpu.memory_space<vmem>>) attributes {dimension_semantics = [#tpu.dimension_semantics<parallel>], iteration_bounds = array<i64: 1>, scalar_prefetch = 0 : i64, scratch_operands = 0 : i64, tpu.core_type = #tpu.core_type<tc>, window_params = [{transform_indices = @transform_0, window_bounds = array<i64: 16, 128>}, {pipeline_mode = #tpu.pipeline_mode<synchronous>, transform_indices = @transform_1, window_bounds = array<i64: 128, 128>}, {pipeline_mode = #tpu.pipeline_mode<synchronous>, transform_indices = @transform_2, window_bounds = array<i64: 1, 128>}, {pipeline_mode = #tpu.pipeline_mode<synchronous>, transform_indices = @transform_3, window_bounds = array<i64: 128, 128>}, {pipeline_mode = #tpu.pipeline_mode<synchronous>, transform_indices = @transform_4, window_bounds = array<i64: 1, 128>}, {transform_indices = @transform_5, window_bounds = array<i64: 16, 128>}]} {
    %c0 = arith.constant 0 : index
    %c0_0 = arith.constant 0 : index
    %0 = vector.load %arg1[%c0, %c0_0] : memref<16x128xf32, #tpu.memory_space<vmem>>, vector<16x128xf32>
    %1 = arith.truncf %0 : vector<16x128xf32> to vector<16x128xbf16>
    %c0_1 = arith.constant 0 : index
    %c0_2 = arith.constant 0 : index
    %2 = vector.load %arg2[%c0_1, %c0_2] : memref<128x128xbf16, #tpu.memory_space<vmem>>, vector<128x128xbf16>
    %cst = arith.constant dense<0.000000e+00> : vector<16x128xf32>
    %3 = tpu.matmul %1, %2, %cst {dimension_numbers = #tpu.dot_dimension_numbers<[1], [0], [0], [1], [0, 0, 1, 1], [], []>} : vector<16x128xbf16>, vector<128x128xbf16>, vector<16x128xf32> -> vector<16x128xf32>
    %c0_3 = arith.constant 0 : index
    %c0_4 = arith.constant 0 : index
    %4 = vector.load %arg3[%c0_3, %c0_4] : memref<1x128xf32, #tpu.memory_space<vmem>>, vector<1x128xf32>
    %5 = vector.broadcast %4 : vector<1x128xf32> to vector<16x128xf32>
    %6 = arith.addf %3, %5 : vector<16x128xf32>
    %cst_5 = arith.constant 0.000000e+00 : f32
    %7 = vector.broadcast %cst_5 : f32 to vector<16x128xf32>
    %8 = arith.maximumf %6, %7 : vector<16x128xf32>
    %9 = arith.truncf %8 : vector<16x128xf32> to vector<16x128xbf16>
    %c0_6 = arith.constant 0 : index
    %c0_7 = arith.constant 0 : index
    %10 = vector.load %arg4[%c0_6, %c0_7] : memref<128x128xbf16, #tpu.memory_space<vmem>>, vector<128x128xbf16>
    %cst_8 = arith.constant dense<0.000000e+00> : vector<16x128xf32>
    %11 = tpu.matmul %9, %10, %cst_8 {dimension_numbers = #tpu.dot_dimension_numbers<[1], [0], [0], [1], [0, 0, 1, 1], [], []>} : vector<16x128xbf16>, vector<128x128xbf16>, vector<16x128xf32> -> vector<16x128xf32>
    %c0_9 = arith.constant 0 : index
    %c0_10 = arith.constant 0 : index
    %12 = vector.load %arg5[%c0_9, %c0_10] : memref<1x128xf32, #tpu.memory_space<vmem>>, vector<1x128xf32>
    %13 = vector.broadcast %12 : vector<1x128xf32> to vector<16x128xf32>
    %14 = arith.addf %11, %13 : vector<16x128xf32>
    %c0_11 = arith.constant 0 : index
    %c0_12 = arith.constant 0 : index
    %15 = vector.load %arg6[%c0_11, %c0_12] : memref<16x128xf32, #tpu.memory_space<vmem>>, vector<16x128xf32>
    tpu.vector_store %arg6[%c0_11, %c0_12], %14 {strides = array<i32>} : memref<16x128xf32, #tpu.memory_space<vmem>>, vector<16x128xf32>,
    return
  }
  func.func @transform_0(%arg0: i32) -> (i32, i32) {
    %c0_i32 = arith.constant 0 : i32
    %c0_i32_0 = arith.constant 0 : i32
    return %arg0, %c0_i32 : i32, i32
  }
  func.func @transform_1(%arg0: i32) -> (i32, i32) {
    %c0_i32 = arith.constant 0 : i32
    %c0_i32_0 = arith.constant 0 : i32
    %c0_i32_1 = arith.constant 0 : i32
    return %c0_i32, %c0_i32_0 : i32, i32
  }
  func.func @transform_2(%arg0: i32) -> (i32, i32) {
    %c0_i32 = arith.constant 0 : i32
    %c0_i32_0 = arith.constant 0 : i32
    %c0_i32_1 = arith.constant 0 : i32
    return %c0_i32, %c0_i32_0 : i32, i32
  }
  func.func @transform_3(%arg0: i32) -> (i32, i32) {
    %c0_i32 = arith.constant 0 : i32
    %c0_i32_0 = arith.constant 0 : i32
    %c0_i32_1 = arith.constant 0 : i32
    return %c0_i32, %c0_i32_0 : i32, i32
  }
  func.func @transform_4(%arg0: i32) -> (i32, i32) {
    %c0_i32 = arith.constant 0 : i32
    %c0_i32_0 = arith.constant 0 : i32
    %c0_i32_1 = arith.constant 0 : i32
    return %c0_i32, %c0_i32_0 : i32, i32
  }
  func.func @transform_5(%arg0: i32) -> (i32, i32) {
    %c0_i32 = arith.constant 0 : i32
    %c0_i32_0 = arith.constant 0 : i32
    return %arg0, %c0_i32 : i32, i32
  }
}

</mosaic_0001>

<llo_original>
// kernel: tpu_custom_call.1
$region0: #{tpu_custom_call.1}
  #allocation0 [shape = 'u32[]', space=smem, size = 0x4, offset = 0x4, fixed_abs, tag = 'smem constant byte address 0x4 - core index']
  #allocation1 [shape = 'u32[144,128]{1,0:T(1,128)}', space=vmem, size = 0x12000, scoped, tag = 'internal scratch']
  %s0 = inlined_call_operand.hbm [shape: f32[16,128], index: 0, kind: input, shape index: {}]
  %s1 = inlined_call_operand.hbm [shape: bf16[128,128], index: 1, kind: input, shape index: {}]
  %s2 = inlined_call_operand.vmem [shape: f32[1,128], index: 2, kind: input, shape index: {}]
  %s3 = inlined_call_operand.hbm [shape: bf16[128,128], index: 3, kind: input, shape index: {}]
  %s4 = inlined_call_operand.vmem [shape: f32[1,128], index: 4, kind: input, shape index: {}]
  %s5 = inlined_call_operand.hbm [shape: f32[16,128], index: 5, kind: output, shape index: {}]
  %s6 = sld [smem:[#allocation0]]
  $region42: #{tpu_custom_call.1} parent=0
    _
  %s8 = ssub.s32 1, %s6
  %s9 = scalar_select 0, %s8, %s6
  $region1: #{tpu_custom_call.1} parent=0
    #allocation2 [shape = 'u8[8192]{0}', space=vmem, size = 0x2000, scoped, tag = 'input window, operand 0, single buffered']
    #allocation3 [shape = 's32[1]{0}', space=sflag, size = 0x4, scoped, tag = 'scoped memory for tpu_custom_call.1']
    #allocation4 [shape = 's32[1]{0}', space=sflag, size = 0x4, scoped, tag = 'scoped memory for tpu_custom_call.1']
    #allocation5 [shape = 'u8[32768]{0}', space=vmem, size = 0x8000, scoped, tag = 'input window, operand 1, single buffered']
    #allocation6 [shape = 's32[1]{0}', space=sflag, size = 0x4, scoped, tag = 'scoped memory for tpu_custom_call.1']
    #allocation7 [shape = 'u8[32768]{0}', space=vmem, size = 0x8000, scoped, tag = 'input window, operand 3, single buffered']
    #allocation8 [shape = 'u8[8192]{0}', space=vmem, size = 0x2000, scoped, tag = 'output window, operand 0, single buffered']
    %10 = vsyncpa [#allocation3], 0
    %11 = vsyncpa [#allocation6], 0
    %12 = vsyncpa [#allocation4], 0
    // Predicated region
    $region2: #{tpu_custom_call.1} parent=1 // pred_check
      _
    $region3: #{tpu_custom_call.1} parent=1 // pred_check_branch
      %14 = sbr.rel (0) target = $region5
    $region4: #{tpu_custom_call.1} parent=1 // pred_region
      %s16 = ssub.s32 256, 256
      %17 = vsyncadd [#allocation3], %s16
      %s18 = sshll.u32 [#allocation2], 4
      %s19 = int_to_ptr.vmem [resolvable:$true] %s18
      %24 = dma.hbm_to_vmem [thread:$0]  %s0, 256, %s19, [#allocation3], 128, 128, 8
    $region5: #{tpu_custom_call.1} parent=1 // pred_fallthru
      _
    // Predicated region
    $region6: #{tpu_custom_call.1} parent=1 // pred_check
      _
    $region7: #{tpu_custom_call.1} parent=1 // pred_check_branch
      %26 = sbr.rel (0) target = $region9
    $region8: #{tpu_custom_call.1} parent=1 // pred_region
      %s28 = ssub.s32 1024, 1024
      %29 = vsyncadd [#allocation6], %s28
      %s30 = sshll.u32 [#allocation5], 4
      %s31 = int_to_ptr.vmem [resolvable:$true] %s30
      %36 = dma.hbm_to_vmem [thread:$0]  %s1, 1024, %s31, [#allocation6], 64, 64, 4
    $region9: #{tpu_custom_call.1} parent=1 // pred_fallthru
      _
    // Predicated region
    $region10: #{tpu_custom_call.1} parent=1 // pred_check
      _
    $region11: #{tpu_custom_call.1} parent=1 // pred_check_branch
      %38 = sbr.rel (0) target = $region13
    $region12: #{tpu_custom_call.1} parent=1 // pred_region
      _
    $region13: #{tpu_custom_call.1} parent=1 // pred_fallthru
      _
    // Predicated region
    $region14: #{tpu_custom_call.1} parent=1 // pred_check
      _
    $region15: #{tpu_custom_call.1} parent=1 // pred_check_branch
      %40 = sbr.rel (0) target = $region17
    $region16: #{tpu_custom_call.1} parent=1 // pred_region
      %s42 = ssub.s32 1024, 1024
      %43 = vsyncadd [#allocation6], %s42
      %s44 = sshll.u32 [#allocation7], 4
      %s45 = int_to_ptr.vmem [resolvable:$true] %s44
      %50 = dma.hbm_to_vmem [thread:$0]  %s3, 1024, %s45, [#allocation6], 64, 64, 4
    $region17: #{tpu_custom_call.1} parent=1 // pred_fallthru
      _
    // Predicated region
    $region18: #{tpu_custom_call.1} parent=1 // pred_check
      _
    $region19: #{tpu_custom_call.1} parent=1 // pred_check_branch
      %52 = sbr.rel (0) target = $region21
    $region20: #{tpu_custom_call.1} parent=1 // pred_region
      _
    $region21: #{tpu_custom_call.1} parent=1 // pred_fallthru
      _
    // Predicated region
    $region22: #{tpu_custom_call.1} parent=1 // pred_check
      _
    $region23: #{tpu_custom_call.1} parent=1 // pred_check_branch
      %54 = sbr.rel (0) target = $region25
    $region24: #{tpu_custom_call.1} parent=1 // pred_region
      %55 = dma.done [#allocation3], 256
    $region25: #{tpu_custom_call.1} parent=1 // pred_fallthru
      _
    // Predicated region
    $region26: #{tpu_custom_call.1} parent=1 // pred_check
      _
    $region27: #{tpu_custom_call.1} parent=1 // pred_check_branch
      %57 = sbr.rel (0) target = $region29
    $region28: #{tpu_custom_call.1} parent=1 // pred_region
      %58 = dma.done [#allocation6], 1024
    $region29: #{tpu_custom_call.1} parent=1 // pred_fallthru
      _
    // Predicated region
    $region30: #{tpu_custom_call.1} parent=1 // pred_check
      _
    $region31: #{tpu_custom_call.1} parent=1 // pred_check_branch
      %60 = sbr.rel (0) target = $region33
    $region32: #{tpu_custom_call.1} parent=1 // pred_region
      %61 = dma.done [#allocation6], 1024
    $region33: #{tpu_custom_call.1} parent=1 // pred_fallthru
      _
    %v63 = vld [vmem:[#allocation2] sm:$0xff]
    %v64 = vld [vmem:[#allocation2 + $0x8] sm:$0xff]
    %v65 = vpack.c.bf16 %v64, %v63
    %v66 = vld [vmem:[#allocation5] sm:$0xf]
    %v67 = vld [vmem:[#allocation5 + $0x4] sm:$0xf]
    %v68 = vld [vmem:[#allocation5 + $0x8] sm:$0xf]
    %v69 = vld [vmem:[#allocation5 + $0xc] sm:$0xf]
    %v70 = vld [vmem:[#allocation5 + $0x10] sm:$0xf]
    %v71 = vld [vmem:[#allocation5 + $0x14] sm:$0xf]
    %v72 = vld [vmem:[#allocation5 + $0x18] sm:$0xf]
    %v73 = vld [vmem:[#allocation5 + $0x1c] sm:$0xf]
    %v74 = vld [vmem:[#allocation5 + $0x20] sm:$0xf]
    %v75 = vld [vmem:[#allocation5 + $0x24] sm:$0xf]
    %v76 = vld [vmem:[#allocation5 + $0x28] sm:$0xf]
    %v77 = vld [vmem:[#allocation5 + $0x2c] sm:$0xf]
    %v78 = vld [vmem:[#allocation5 + $0x30] sm:$0xf]
    %v79 = vld [vmem:[#allocation5 + $0x34] sm:$0xf]
    %v80 = vld [vmem:[#allocation5 + $0x38] sm:$0xf]
    %v81 = vld [vmem:[#allocation5 + $0x3c] sm:$0xf]
    %v82 = vld [vmem:[%s2] sm:$0x1]
    %v84 = vlaneseq
    %v85 = vshrl.u32 %v84, 7
    %v86 = vsub.s32 0, %v85
    %v87 = vrot.slane %v82, %v86
    %v105 = vunpack.c.l.b16 %v66
    %v106 = vunpack.c.l.b16 %v67
    %v107 = vunpack.c.l.b16 %v68
    %v108 = vunpack.c.l.b16 %v69
    %v109 = vunpack.c.l.b16 %v70
    %v110 = vunpack.c.l.b16 %v71
    %v111 = vunpack.c.l.b16 %v72
    %v112 = vunpack.c.l.b16 %v73
    %v113 = vunpack.c.l.b16 %v74
    %v114 = vunpack.c.l.b16 %v75
    %v115 = vunpack.c.l.b16 %v76
    %v116 = vunpack.c.l.b16 %v77
    %v117 = vunpack.c.l.b16 %v78
    %v118 = vunpack.c.l.b16 %v79
    %v119 = vunpack.c.l.b16 %v80
    %v120 = vunpack.c.l.b16 %v81
    %v121 = vpack.c.b16 %v106, %v105
    %v122 = vpack.c.b16 %v108, %v107
    %v123 = vpack.c.b16 %v110, %v109
    %v124 = vpack.c.b16 %v112, %v111
    %v125 = vpack.c.b16 %v114, %v113
    %v126 = vpack.c.b16 %v116, %v115
    %v127 = vpack.c.b16 %v118, %v117
    %v128 = vpack.c.b16 %v120, %v119
    %137 = vmatprep.subr.bf16.mxu0 0
    %138 = vmatpush1.bf16.msra.mxu0 %v121
    %139 = vmatprep.subr.bf16.mxu0 0
    %140 = vmatpush1.bf16.msra.mxu0 %v122
    %141 = vmatprep.subr.bf16.mxu0 0
    %142 = vmatpush1.bf16.msra.mxu0 %v123
    %143 = vmatprep.subr.bf16.mxu0 0
    %144 = vmatpush1.bf16.msra.mxu0 %v124
    %145 = vmatprep.subr.bf16.mxu0 0
    %146 = vmatpush1.bf16.msra.mxu0 %v125
    %147 = vmatprep.subr.bf16.mxu0 0
    %148 = vmatpush1.bf16.msra.mxu0 %v126
    %149 = vmatprep.subr.bf16.mxu0 0
    %150 = vmatpush1.bf16.msra.mxu0 %v127
    %151 = vmatprep.subr.bf16.mxu0 0
    %152 = vmatpush1.bf16.msra.mxu0 %v128
    %153 = vmatprep.subr.bf16.mxu0 0
    %154 = vmatpush1.bf16.msra.mxu0 0
    %155 = vmatprep.subr.bf16.mxu0 0
    %156 = vmatpush1.bf16.msra.mxu0 0
    %157 = vmatprep.subr.bf16.mxu0 0
    %158 = vmatpush1.bf16.msra.mxu0 0
    %159 = vmatprep.subr.bf16.mxu0 0
    %160 = vmatpush1.bf16.msra.mxu0 0
    %161 = vmatprep.subr.bf16.mxu0 0
    %162 = vmatpush1.bf16.msra.mxu0 0
    %163 = vmatprep.subr.bf16.mxu0 0
    %164 = vmatpush1.bf16.msra.mxu0 0
    %165 = vmatprep.subr.bf16.mxu0 0
    %166 = vmatpush1.bf16.msra.mxu0 0
    %167 = vmatprep.subr.bf16.mxu0 0
    %168 = vmatpush1.bf16.msra.mxu0 0
    %169 = vmatprep.mubr.bf16.mxu0 0
    %170 = vmatmul.mubr.bf16.gmra.mrb[0].mxu0 %v65
    %v171 = vpop.f32.mrb[0].mxu0
    %v172 = vadd.f32 %v87, %v171
    %v173 = vpop.f32.mrb[0].mxu0
    %v174 = vpop.f32.mrb[0].mxu0
    %v175 = vadd.f32 %v87, %v174
    %v176 = vpop.f32.mrb[0].mxu0
    %177 = vdwg.mxu0
    %v178 = vmax.f32 %v172, 0.0
    %v179 = vmax.f32 %v175, 0.0
    %v180 = vpack.c.bf16 %v179, %v178
    %v181 = vld [vmem:[#allocation7] sm:$0xf]
    %v182 = vld [vmem:[#allocation7 + $0x4] sm:$0xf]
    %v183 = vld [vmem:[#allocation7 + $0x8] sm:$0xf]
    %v184 = vld [vmem:[#allocation7 + $0xc] sm:$0xf]
    %v185 = vld [vmem:[#allocation7 + $0x10] sm:$0xf]
    %v186 = vld [vmem:[#allocation7 + $0x14] sm:$0xf]
    %v187 = vld [vmem:[#allocation7 + $0x18] sm:$0xf]
    %v188 = vld [vmem:[#allocation7 + $0x1c] sm:$0xf]
    %v189 = vld [vmem:[#allocation7 + $0x20] sm:$0xf]
    %v190 = vld [vmem:[#allocation7 + $0x24] sm:$0xf]
    %v191 = vld [vmem:[#allocation7 + $0x28] sm:$0xf]
    %v192 = vld [vmem:[#allocation7 + $0x2c] sm:$0xf]
    %v193 = vld [vmem:[#allocation7 + $0x30] sm:$0xf]
    %v194 = vld [vmem:[#allocation7 + $0x34] sm:$0xf]
    %v195 = vld [vmem:[#allocation7 + $0x38] sm:$0xf]
    %v196 = vld [vmem:[#allocation7 + $0x3c] sm:$0xf]
    %v197 = vld [vmem:[%s4] sm:$0x1]
    %v199 = vlaneseq
    %v200 = vshrl.u32 %v199, 7
    %v201 = vsub.s32 0, %v200
    %v202 = vrot.slane %v197, %v201
    %v220 = vunpack.c.l.b16 %v181
    %v221 = vunpack.c.l.b16 %v182
    %v222 = vunpack.c.l.b16 %v183
    %v223 = vunpack.c.l.b16 %v184
    %v224 = vunpack.c.l.b16 %v185
    %v225 = vunpack.c.l.b16 %v186
    %v226 = vunpack.c.l.b16 %v187
    %v227 = vunpack.c.l.b16 %v188
    %v228 = vunpack.c.l.b16 %v189
    %v229 = vunpack.c.l.b16 %v190
    %v230 = vunpack.c.l.b16 %v191
    %v231 = vunpack.c.l.b16 %v192
    %v232 = vunpack.c.l.b16 %v193
    %v233 = vunpack.c.l.b16 %v194
    %v234 = vunpack.c.l.b16 %v195
    %v235 = vunpack.c.l.b16 %v196
    %v236 = vpack.c.b16 %v221, %v220
    %v237 = vpack.c.b16 %v223, %v222
    %v238 = vpack.c.b16 %v225, %v224
    %v239 = vpack.c.b16 %v227, %v226
    %v240 = vpack.c.b16 %v229, %v228
    %v241 = vpack.c.b16 %v231, %v230
    %v242 = vpack.c.b16 %v233, %v232
    %v243 = vpack.c.b16 %v235, %v234
    %252 = vmatprep.subr.bf16.mxu0 0
    %253 = vmatpush1.bf16.msra.mxu0 %v236
    %254 = vmatprep.subr.bf16.mxu0 0
    %255 = vmatpush1.bf16.msra.mxu0 %v237
    %256 = vmatprep.subr.bf16.mxu0 0
    %257 = vmatpush1.bf16.msra.mxu0 %v238
    %258 = vmatprep.subr.bf16.mxu0 0
    %259 = vmatpush1.bf16.msra.mxu0 %v239
    %260 = vmatprep.subr.bf16.mxu0 0
    %261 = vmatpush1.bf16.msra.mxu0 %v240
    %262 = vmatprep.subr.bf16.mxu0 0
    %263 = vmatpush1.bf16.msra.mxu0 %v241
    %264 = vmatprep.subr.bf16.mxu0 0
    %265 = vmatpush1.bf16.msra.mxu0 %v242
    %266 = vmatprep.subr.bf16.mxu0 0
    %267 = vmatpush1.bf16.msra.mxu0 %v243
    %268 = vmatprep.subr.bf16.mxu0 0
    %269 = vmatpush1.bf16.msra.mxu0 0
    %270 = vmatprep.subr.bf16.mxu0 0
    %271 = vmatpush1.bf16.msra.mxu0 0
    %272 = vmatprep.subr.bf16.mxu0 0
    %273 = vmatpush1.bf16.msra.mxu0 0
    %274 = vmatprep.subr.bf16.mxu0 0
    %275 = vmatpush1.bf16.msra.mxu0 0
    %276 = vmatprep.subr.bf16.mxu0 0
    %277 = vmatpush1.bf16.msra.mxu0 0
    %278 = vmatprep.subr.bf16.mxu0 0
    %279 = vmatpush1.bf16.msra.mxu0 0
    %280 = vmatprep.subr.bf16.mxu0 0
    %281 = vmatpush1.bf16.msra.mxu0 0
    %282 = vmatprep.subr.bf16.mxu0 0
    %283 = vmatpush1.bf16.msra.mxu0 0
    %284 = vmatprep.mubr.bf16.mxu0 0
    %285 = vmatmul.mubr.bf16.gmra.mrb[0].mxu0 %v180
    %v286 = vpop.f32.mrb[0].mxu0
    %v287 = vadd.f32 %v202, %v286
    %v288 = vpop.f32.mrb[0].mxu0
    %v289 = vpop.f32.mrb[0].mxu0
    %v290 = vadd.f32 %v202, %v289
    %v291 = vpop.f32.mrb[0].mxu0
    %292 = vdwg.mxu0
    %293 = vst [vmem:[#allocation8] sm:$0xff] %v287
    %294 = vst [vmem:[#allocation8 + $0x8] sm:$0xff] %v290
    // Predicated region
    $region34: #{tpu_custom_call.1} parent=1 // pred_check
      _
    $region35: #{tpu_custom_call.1} parent=1 // pred_check_branch
      %296 = sbr.rel (0) target = $region37
    $region36: #{tpu_custom_call.1} parent=1 // pred_region
      %s298 = ssub.s32 256, 256
      %299 = vsyncadd [#allocation4], %s298
      %s300 = sshll.u32 [#allocation8], 4
      %s301 = int_to_ptr.vmem [resolvable:$true] %s300
      %306 = dma.vmem_to_hbm [thread:$0]  %s301, 256, %s5, [#allocation4], 128, 128, 8
    $region37: #{tpu_custom_call.1} parent=1 // pred_fallthru
      _
    // Predicated region
    $region38: #{tpu_custom_call.1} parent=1 // pred_check
      _
    $region39: #{tpu_custom_call.1} parent=1 // pred_check_branch
      %308 = sbr.rel (0) target = $region41
    $region40: #{tpu_custom_call.1} parent=1 // pred_region
      %309 = dma.done [#allocation4], 256
    $region41: #{tpu_custom_call.1} parent=1 // pred_fallthru
      _
    %310 = vsyncpa [#allocation3], 1
    %311 = vsyncpa [#allocation6], 1
    %312 = vsyncpa [#allocation4], 1

// kernel: tpu_custom_call.1
$region0: #{tpu_custom_call.1}
  #allocation0 [shape = 'u32[]', space=smem, size = 0x4, offset = 0x4, fixed_abs, tag = 'smem constant byte address 0x4 - core index']
  #allocation1 [shape = 'u32[144,128]{1,0:T(1,128)}', space=vmem, size = 0x12000, scoped, tag = 'internal scratch']
  %s0 = inlined_call_operand.hbm [shape: f32[16,128], index: 0, kind: input, shape index: {}]
  %s1 = inlined_call_operand.hbm [shape: bf16[128,128], index: 1, kind: input, shape index: {}]
  %s2 = inlined_call_operand.vmem [shape: f32[1,128], index: 2, kind: input, shape index: {}]
  %s3 = inlined_call_operand.hbm [shape: bf16[128,128], index: 3, kind: input, shape index: {}]
  %s4 = inlined_call_operand.vmem [shape: f32[1,128], index: 4, kind: input, shape index: {}]
  %s5 = inlined_call_operand.hbm [shape: f32[16,128], index: 5, kind: output, shape index: {}]
  %s6 = sld [smem:[#allocation0]]
  $region42: #{tpu_custom_call.1} parent=0
    _
  %s8 = ssub.s32 1, %s6
  %s9 = scalar_select 0, %s8, %s6
  $region1: #{tpu_custom_call.1} parent=0
    #allocation2 [shape = 'u8[8192]{0}', space=vmem, size = 0x2000, scoped, tag = 'input window, operand 0, single buffered']
    #allocation3 [shape = 's32[1]{0}', space=sflag, size = 0x4, scoped, tag = 'scoped memory for tpu_custom_call.1']
    #allocation4 [shape = 's32[1]{0}', space=sflag, size = 0x4, scoped, tag = 'scoped memory for tpu_custom_call.1']
    #allocation5 [shape = 'u8[32768]{0}', space=vmem, size = 0x8000, scoped, tag = 'input window, operand 1, single buffered']
    #allocation6 [shape = 's32[1]{0}', space=sflag, size = 0x4, scoped, tag = 'scoped memory for tpu_custom_call.1']
    #allocation7 [shape = 'u8[32768]{0}', space=vmem, size = 0x8000, scoped, tag = 'input window, operand 3, single buffered']
    #allocation8 [shape = 'u8[8192]{0}', space=vmem, size = 0x2000, scoped, tag = 'output window, operand 0, single buffered']
    %10 = vsyncpa [#allocation3], 0
    %11 = vsyncpa [#allocation6], 0
    %12 = vsyncpa [#allocation4], 0
    // Predicated region
    $region2: #{tpu_custom_call.1} parent=1 // pred_check
      _
    $region3: #{tpu_custom_call.1} parent=1 // pred_check_branch
      %14 = sbr.rel (0) target = $region5
    $region4: #{tpu_custom_call.1} parent=1 // pred_region
      %s16 = ssub.s32 256, 256
      %17 = vsyncadd [#allocation3], %s16
      %s18 = sshll.u32 [#allocation2], 4
      %s19 = int_to_ptr.vmem [resolvable:$true] %s18
      %24 = dma.hbm_to_vmem [thread:$0]  %s0, 256, %s19, [#allocation3], 128, 128, 8
    $region5: #{tpu_custom_call.1} parent=1 // pred_fallthru
      _
    // Predicated region
    $region6: #{tpu_custom_call.1} parent=1 // pred_check
      _
    $region7: #{tpu_custom_call.1} parent=1 // pred_check_branch
      %26 = sbr.rel (0) target = $region9
    $region8: #{tpu_custom_call.1} parent=1 // pred_region
      %s28 = ssub.s32 1024, 1024
      %29 = vsyncadd [#allocation6], %s28
      %s30 = sshll.u32 [#allocation5], 4
      %s31 = int_to_ptr.vmem [resolvable:$true] %s30
      %36 = dma.hbm_to_vmem [thread:$0]  %s1, 1024, %s31, [#allocation6], 64, 64, 4
    $region9: #{tpu_custom_call.1} parent=1 // pred_fallthru
      _
    // Predicated region
    $region10: #{tpu_custom_call.1} parent=1 // pred_check
      _
    $region11: #{tpu_custom_call.1} parent=1 // pred_check_branch
      %38 = sbr.rel (0) target = $region13
    $region12: #{tpu_custom_call.1} parent=1 // pred_region
      _
    $region13: #{tpu_custom_call.1} parent=1 // pred_fallthru
      _
    // Predicated region
    $region14: #{tpu_custom_call.1} parent=1 // pred_check
      _
    $region15: #{tpu_custom_call.1} parent=1 // pred_check_branch
      %40 = sbr.rel (0) target = $region17
    $region16: #{tpu_custom_call.1} parent=1 // pred_region
      %s42 = ssub.s32 1024, 1024
      %43 = vsyncadd [#allocation6], %s42
      %s44 = sshll.u32 [#allocation7], 4
      %s45 = int_to_ptr.vmem [resolvable:$true] %s44
      %50 = dma.hbm_to_vmem [thread:$0]  %s3, 1024, %s45, [#allocation6], 64, 64, 4
    $region17: #{tpu_custom_call.1} parent=1 // pred_fallthru
      _
    // Predicated region
    $region18: #{tpu_custom_call.1} parent=1 // pred_check
      _
    $region19: #{tpu_custom_call.1} parent=1 // pred_check_branch
      %52 = sbr.rel (0) target = $region21
    $region20: #{tpu_custom_call.1} parent=1 // pred_region
      _
    $region21: #{tpu_custom_call.1} parent=1 // pred_fallthru
      _
    // Predicated region
    $region22: #{tpu_custom_call.1} parent=1 // pred_check
      _
    $region23: #{tpu_custom_call.1} parent=1 // pred_check_branch
      %54 = sbr.rel (0) target = $region25
    $region24: #{tpu_custom_call.1} parent=1 // pred_region
      %55 = dma.done [#allocation3], 256
    $region25: #{tpu_custom_call.1} parent=1 // pred_fallthru
      _
    // Predicated region
    $region26: #{tpu_custom_call.1} parent=1 // pred_check
      _
    $region27: #{tpu_custom_call.1} parent=1 // pred_check_branch
      %57 = sbr.rel (0) target = $region29
    $region28: #{tpu_custom_call.1} parent=1 // pred_region
      %58 = dma.done [#allocation6], 1024
    $region29: #{tpu_custom_call.1} parent=1 // pred_fallthru
      _
    // Predicated region
    $region30: #{tpu_custom_call.1} parent=1 // pred_check
      _
    $region31: #{tpu_custom_call.1} parent=1 // pred_check_branch
      %60 = sbr.rel (0) target = $region33
    $region32: #{tpu_custom_call.1} parent=1 // pred_region
      %61 = dma.done [#allocation6], 1024
    $region33: #{tpu_custom_call.1} parent=1 // pred_fallthru
      _
    %v63 = vld [vmem:[#allocation2] sm:$0xff]
    %v64 = vld [vmem:[#allocation2 + $0x8] sm:$0xff]
    %v65 = vpack.c.bf16 %v64, %v63
    %v66 = vld [vmem:[#allocation5] sm:$0xf]
    %v67 = vld [vmem:[#allocation5 + $0x4] sm:$0xf]
    %v68 = vld [vmem:[#allocation5 + $0x8] sm:$0xf]
    %v69 = vld [vmem:[#allocation5 + $0xc] sm:$0xf]
    %v70 = vld [vmem:[#allocation5 + $0x10] sm:$0xf]
    %v71 = vld [vmem:[#allocation5 + $0x14] sm:$0xf]
    %v72 = vld [vmem:[#allocation5 + $0x18] sm:$0xf]
    %v73 = vld [vmem:[#allocation5 + $0x1c] sm:$0xf]
    %v74 = vld [vmem:[#allocation5 + $0x20] sm:$0xf]
    %v75 = vld [vmem:[#allocation5 + $0x24] sm:$0xf]
    %v76 = vld [vmem:[#allocation5 + $0x28] sm:$0xf]
    %v77 = vld [vmem:[#allocation5 + $0x2c] sm:$0xf]
    %v78 = vld [vmem:[#allocation5 + $0x30] sm:$0xf]
    %v79 = vld [vmem:[#allocation5 + $0x34] sm:$0xf]
    %v80 = vld [vmem:[#allocation5 + $0x38] sm:$0xf]
    %v81 = vld [vmem:[#allocation5 + $0x3c] sm:$0xf]
    %v82 = vld [vmem:[%s2] sm:$0x1]
    %v84 = vlaneseq
    %v85 = vshrl.u32 %v84, 7
    %v86 = vsub.s32 0, %v85
    %v87 = vrot.slane %v82, %v86
    %v105 = vunpack.c.l.b16 %v66
    %v106 = vunpack.c.l.b16 %v67
    %v107 = vunpack.c.l.b16 %v68
    %v108 = vunpack.c.l.b16 %v69
    %v109 = vunpack.c.l.b16 %v70
    %v110 = vunpack.c.l.b16 %v71
    %v111 = vunpack.c.l.b16 %v72
    %v112 = vunpack.c.l.b16 %v73
    %v113 = vunpack.c.l.b16 %v74
    %v114 = vunpack.c.l.b16 %v75
    %v115 = vunpack.c.l.b16 %v76
    %v116 = vunpack.c.l.b16 %v77
    %v117 = vunpack.c.l.b16 %v78
    %v118 = vunpack.c.l.b16 %v79
    %v119 = vunpack.c.l.b16 %v80
    %v120 = vunpack.c.l.b16 %v81
    %v121 = vpack.c.b16 %v106, %v105
    %v122 = vpack.c.b16 %v108, %v107
    %v123 = vpack.c.b16 %v110, %v109
    %v124 = vpack.c.b16 %v112, %v111
    %v125 = vpack.c.b16 %v114, %v113
    %v126 = vpack.c.b16 %v116, %v115
    %v127 = vpack.c.b16 %v118, %v117
    %v128 = vpack.c.b16 %v120, %v119
    %137 = vmatprep.subr.bf16.mxu0 0
    %138 = vmatpush1.bf16.msra.mxu0 %v121
    %139 = vmatprep.subr.bf16.mxu0 0
    %140 = vmatpush1.bf16.msra.mxu0 %v122
    %141 = vmatprep.subr.bf16.mxu0 0
    %142 = vmatpush1.bf16.msra.mxu0 %v123
    %143 = vmatprep.subr.bf16.mxu0 0
    %144 = vmatpush1.bf16.msra.mxu0 %v124
    %145 = vmatprep.subr.bf16.mxu0 0
    %146 = vmatpush1.bf16.msra.mxu0 %v125
    %147 = vmatprep.subr.bf16.mxu0 0
    %148 = vmatpush1.bf16.msra.mxu0 %v126
    %149 = vmatprep.subr.bf16.mxu0 0
    %150 = vmatpush1.bf16.msra.mxu0 %v127
    %151 = vmatprep.subr.bf16.mxu0 0
    %152 = vmatpush1.bf16.msra.mxu0 %v128
    %153 = vmatprep.subr.bf16.mxu0 0
    %154 = vmatpush1.bf16.msra.mxu0 0
    %155 = vmatprep.subr.bf16.mxu0 0
    %156 = vmatpush1.bf16.msra.mxu0 0
    %157 = vmatprep.subr.bf16.mxu0 0
    %158 = vmatpush1.bf16.msra.mxu0 0
    %159 = vmatprep.subr.bf16.mxu0 0
    %160 = vmatpush1.bf16.msra.mxu0 0
    %161 = vmatprep.subr.bf16.mxu0 0
    %162 = vmatpush1.bf16.msra.mxu0 0
    %163 = vmatprep.subr.bf16.mxu0 0
    %164 = vmatpush1.bf16.msra.mxu0 0
    %165 = vmatprep.subr.bf16.mxu0 0
    %166 = vmatpush1.bf16.msra.mxu0 0
    %167 = vmatprep.subr.bf16.mxu0 0
    %168 = vmatpush1.bf16.msra.mxu0 0
    %169 = vmatprep.mubr.bf16.mxu0 0
    %170 = vmatmul.mubr.bf16.gmra.mrb[0].mxu0 %v65
    %v171 = vpop.f32.mrb[0].mxu0
    %v172 = vadd.f32 %v87, %v171
    %v173 = vpop.f32.mrb[0].mxu0
    %v174 = vpop.f32.mrb[0].mxu0
    %v175 = vadd.f32 %v87, %v174
    %v176 = vpop.f32.mrb[0].mxu0
    %177 = vdwg.mxu0
    %v178 = vmax.f32 %v172, 0.0
    %v179 = vmax.f32 %v175, 0.0
    %v180 = vpack.c.bf16 %v179, %v178
    %v181 = vld [vmem:[#allocation7] sm:$0xf]
    %v182 = vld [vmem:[#allocation7 + $0x4] sm:$0xf]
    %v183 = vld [vmem:[#allocation7 + $0x8] sm:$0xf]
    %v184 = vld [vmem:[#allocation7 + $0xc] sm:$0xf]
    %v185 = vld [vmem:[#allocation7 + $0x10] sm:$0xf]
    %v186 = vld [vmem:[#allocation7 + $0x14] sm:$0xf]
    %v187 = vld [vmem:[#allocation7 + $0x18] sm:$0xf]
    %v188 = vld [vmem:[#allocation7 + $0x1c] sm:$0xf]
    %v189 = vld [vmem:[#allocation7 + $0x20] sm:$0xf]
    %v190 = vld [vmem:[#allocation7 + $0x24] sm:$0xf]
    %v191 = vld [vmem:[#allocation7 + $0x28] sm:$0xf]
    %v192 = vld [vmem:[#allocation7 + $0x2c] sm:$0xf]
    %v193 = vld [vmem:[#allocation7 + $0x30] sm:$0xf]
    %v194 = vld [vmem:[#allocation7 + $0x34] sm:$0xf]
    %v195 = vld [vmem:[#allocation7 + $0x38] sm:$0xf]
    %v196 = vld [vmem:[#allocation7 + $0x3c] sm:$0xf]
    %v197 = vld [vmem:[%s4] sm:$0x1]
    %v199 = vlaneseq
    %v200 = vshrl.u32 %v199, 7
    %v201 = vsub.s32 0, %v200
    %v202 = vrot.slane %v197, %v201
    %v220 = vunpack.c.l.b16 %v181
    %v221 = vunpack.c.l.b16 %v182
    %v222 = vunpack.c.l.b16 %v183
    %v223 = vunpack.c.l.b16 %v184
    %v224 = vunpack.c.l.b16 %v185
    %v225 = vunpack.c.l.b16 %v186
    %v226 = vunpack.c.l.b16 %v187
    %v227 = vunpack.c.l.b16 %v188
    %v228 = vunpack.c.l.b16 %v189
    %v229 = vunpack.c.l.b16 %v190
    %v230 = vunpack.c.l.b16 %v191
    %v231 = vunpack.c.l.b16 %v192
    %v232 = vunpack.c.l.b16 %v193
    %v233 = vunpack.c.l.b16 %v194
    %v234 = vunpack.c.l.b16 %v195
    %v235 = vunpack.c.l.b16 %v196
    %v236 = vpack.c.b16 %v221, %v220
    %v237 = vpack.c.b16 %v223, %v222
    %v238 = vpack.c.b16 %v225, %v224
    %v239 = vpack.c.b16 %v227, %v226
    %v240 = vpack.c.b16 %v229, %v228
    %v241 = vpack.c.b16 %v231, %v230
    %v242 = vpack.c.b16 %v233, %v232
    %v243 = vpack.c.b16 %v235, %v234
    %252 = vmatprep.subr.bf16.mxu0 0
    %253 = vmatpush1.bf16.msra.mxu0 %v236
    %254 = vmatprep.subr.bf16.mxu0 0
    %255 = vmatpush1.bf16.msra.mxu0 %v237
    %256 = vmatprep.subr.bf16.mxu0 0
    %257 = vmatpush1.bf16.msra.mxu0 %v238
    %258 = vmatprep.subr.bf16.mxu0 0
    %259 = vmatpush1.bf16.msra.mxu0 %v239
    %260 = vmatprep.subr.bf16.mxu0 0
    %261 = vmatpush1.bf16.msra.mxu0 %v240
    %262 = vmatprep.subr.bf16.mxu0 0
    %263 = vmatpush1.bf16.msra.mxu0 %v241
    %264 = vmatprep.subr.bf16.mxu0 0
    %265 = vmatpush1.bf16.msra.mxu0 %v242
    %266 = vmatprep.subr.bf16.mxu0 0
    %267 = vmatpush1.bf16.msra.mxu0 %v243
    %268 = vmatprep.subr.bf16.mxu0 0
    %269 = vmatpush1.bf16.msra.mxu0 0
    %270 = vmatprep.subr.bf16.mxu0 0
    %271 = vmatpush1.bf16.msra.mxu0 0
    %272 = vmatprep.subr.bf16.mxu0 0
    %273 = vmatpush1.bf16.msra.mxu0 0
    %274 = vmatprep.subr.bf16.mxu0 0
    %275 = vmatpush1.bf16.msra.mxu0 0
    %276 = vmatprep.subr.bf16.mxu0 0
    %277 = vmatpush1.bf16.msra.mxu0 0
    %278 = vmatprep.subr.bf16.mxu0 0
    %279 = vmatpush1.bf16.msra.mxu0 0
    %280 = vmatprep.subr.bf16.mxu0 0
    %281 = vmatpush1.bf16.msra.mxu0 0
    %282 = vmatprep.subr.bf16.mxu0 0
    %283 = vmatpush1.bf16.msra.mxu0 0
    %284 = vmatprep.mubr.bf16.mxu0 0
    %285 = vmatmul.mubr.bf16.gmra.mrb[0].mxu0 %v180
    %v286 = vpop.f32.mrb[0].mxu0
    %v287 = vadd.f32 %v202, %v286
    %v288 = vpop.f32.mrb[0].mxu0
    %v289 = vpop.f32.mrb[0].mxu0
    %v290 = vadd.f32 %v202, %v289
    %v291 = vpop.f32.mrb[0].mxu0
    %292 = vdwg.mxu0
    %293 = vst [vmem:[#allocation8] sm:$0xff] %v287
    %294 = vst [vmem:[#allocation8 + $0x8] sm:$0xff] %v290
    // Predicated region
    $region34: #{tpu_custom_call.1} parent=1 // pred_check
      _
    $region35: #{tpu_custom_call.1} parent=1 // pred_check_branch
      %296 = sbr.rel (0) target = $region37
    $region36: #{tpu_custom_call.1} parent=1 // pred_region
      %s298 = ssub.s32 256, 256
      %299 = vsyncadd [#allocation4], %s298
      %s300 = sshll.u32 [#allocation8], 4
      %s301 = int_to_ptr.vmem [resolvable:$true] %s300
      %306 = dma.vmem_to_hbm [thread:$0]  %s301, 256, %s5, [#allocation4], 128, 128, 8
    $region37: #{tpu_custom_call.1} parent=1 // pred_fallthru
      _
    // Predicated region
    $region38: #{tpu_custom_call.1} parent=1 // pred_check
      _
    $region39: #{tpu_custom_call.1} parent=1 // pred_check_branch
      %308 = sbr.rel (0) target = $region41
    $region40: #{tpu_custom_call.1} parent=1 // pred_region
      %309 = dma.done [#allocation4], 256
    $region41: #{tpu_custom_call.1} parent=1 // pred_fallthru
      _
    %310 = vsyncpa [#allocation3], 1
    %311 = vsyncpa [#allocation6], 1
    %312 = vsyncpa [#allocation4], 1

</llo_original>
